<compile_context>
chip_gen: v5e
topology: v5e:2x2
jax: 0.10.0
libtpu: 0.0.40
codegen_flags: <defaults>
</compile_context>

<pallas_src>
import jax
import jax.numpy as jnp
import numpy as np
from jax.experimental import pallas as pl
from jax.experimental.pallas import tpu as pltpu


_MAX_BATCH_TILE = 65536                  # ~20 MiB peak VMEM at the cap
_VMEM_LIMIT_BYTES = 48 * 1024 * 1024     # > v5e 16 MiB default, < v7x 64 MiB physical


def _round_up(v, m):
    return ((int(v) + m - 1) // m) * m


def _mlp_kernel(x_ref, p_ref, o_ref):
    """x_ref: [4, bt] feature-major tile.  p_ref: [64, 17] packed params."""
    x = x_ref[...]                                          # [4,  bt]

    # Static, sublane-tile-aligned slices of the resident parameter slab.
    w1 = p_ref[0:16, 0:4];    b1 = p_ref[0:16, 16:17]       # Linear(4, 16)
    w2 = p_ref[16:32, 0:16];  b2 = p_ref[16:32, 16:17]      # Linear(16, 16)
    w3 = p_ref[32:48, 0:16];  b3 = p_ref[32:48, 16:17]      # Linear(16, 16)
    w4 = p_ref[48:52, 0:16];  b4 = p_ref[48:52, 16:17]      # Linear(16, 4)

    h = jnp.tanh(jnp.dot(w1, x, preferred_element_type=jnp.float32) + b1)  # [16, bt]
    h = jnp.tanh(jnp.dot(w2, h, preferred_element_type=jnp.float32) + b2)  # [16, bt]
    h = jnp.tanh(jnp.dot(w3, h, preferred_element_type=jnp.float32) + b3)  # [16, bt]
    h = jnp.tanh(jnp.dot(w4, h, preferred_element_type=jnp.float32) + b4)  # [4,  bt]

    # forward(): self.controller(x) * 50
    o_ref[...] = h * 50.0


def _pack_params(params):
    """Pack nn.Linear weights/biases into one [64, 17] slab.

    Layer l occupies rows 16*l : 16*l + out_l; weight in cols [0, in_l),
    bias in column 16.  Row offsets are multiples of 8 (sublane aligned).
    """
    slab = jnp.zeros((64, 17), jnp.float32)
    slab = slab.at[0:16, 0:4].set(params["w1"].astype(jnp.float32))
    slab = slab.at[0:16, 16:17].set(params["b1"].astype(jnp.float32))
    slab = slab.at[16:32, 0:16].set(params["w2"].astype(jnp.float32))
    slab = slab.at[16:32, 16:17].set(params["b2"].astype(jnp.float32))
    slab = slab.at[32:48, 0:16].set(params["w3"].astype(jnp.float32))
    slab = slab.at[32:48, 16:17].set(params["b3"].astype(jnp.float32))
    slab = slab.at[48:52, 0:16].set(params["w4"].astype(jnp.float32))
    slab = slab.at[48:52, 16:17].set(params["b4"].astype(jnp.float32))
    return slab


def controller_external_derivatives_v1(x, params, *, batch_tile=32768):
    """x: [B, 4].  params: nn.Linear-layout weights [out, in], biases [out, 1]."""
    B = int(x.shape[0])

    # --- batch-tile selection -------------------------------------------------
    # Round any user value up to a lane multiple (non-128 tiles violate the
    # (8,128) BlockSpec rule) and cap it so VMEM stays comfortable everywhere.
    bt_cap = min(_MAX_BATCH_TILE, max(128, _round_up(batch_tile, 128)))
    # Prefer >= 2 grid steps when the batch allows it, so both v7x TensorCores
    # get a share of the "parallel" axis; large batches simply use the cap.
    bt = min(bt_cap, max(128, _round_up(pl.cdiv(B, 2), 128)))

    b128 = _round_up(B, 128)             # pad only to the 128-lane boundary
    n_tiles = pl.cdiv(b128, bt)          # ragged last tile -> Pallas masking

    # --- minimal layout plumbing ----------------------------------------------
    xt = x.astype(jnp.float32).T                     # [4, B]   feature-major
    if b128 != B:
        xt = jnp.pad(xt, ((0, 0), (0, b128 - B)))    # [4, b128]
    slab = _pack_params(params)                      # [64, 17] resident params

    resident = lambda i: (0, 0)

    # Advisory cost hint for XLA scheduling around the custom call.
    covered = n_tiles * bt
    flops = 2 * (4 * 16 + 16 * 16 + 16 * 16 + 16 * 4) * covered
    transcendentals = (16 + 16 + 16 + 4) * covered
    bytes_accessed = 2 * 4 * 4 * covered + 64 * 17 * 4

    out = pl.pallas_call(
        _mlp_kernel,
        out_shape=jax.ShapeDtypeStruct((4, b128), jnp.float32),
        grid_spec=pltpu.PrefetchScalarGridSpec(
            num_scalar_prefetch=0,
            grid=(n_tiles,),
            in_specs=[
                pl.BlockSpec((4, bt), lambda i: (0, i)),   # x tile (pipelined)
                pl.BlockSpec((64, 17), resident),          # packed weights+biases
            ],
            out_specs=pl.BlockSpec((4, bt), lambda i: (0, i)),
        ),
        compiler_params=pltpu.CompilerParams(
            dimension_semantics=("parallel",),     # shard tiles across TCs on v7x
            vmem_limit_bytes=_VMEM_LIMIT_BYTES,    # large tiles on v5e/v7x too
        ),
        cost_estimate=pl.CostEstimate(flops=flops,
                                      transcendentals=transcendentals,
                                      bytes_accessed=bytes_accessed),
    )(xt, slab)

    # Back to the module's [B, 4] batch-major view; slice fuses into the transpose.
    return out[:, :B].T


def init_params(key):
    """Deterministic init mimicking nn.Linear: weight [out,in], bias kept as [out,1]."""
    def linear(key, fan_in, fan_out):
        kw, kb = jax.random.split(key)
        bound = 1.0 / np.sqrt(fan_in)
        w = jax.random.uniform(kw, (fan_out, fan_in), jnp.float32, -bound, bound)
        b = jax.random.uniform(kb, (fan_out, 1), jnp.float32, -bound, bound)
        return w, b

    k1, k2, k3, k4 = jax.random.split(key, 4)
    w1, b1 = linear(k1, 4, 16)     # controller[0] = Linear(4, 16)
    w2, b2 = linear(k2, 16, 16)    # Linear(16, 16)
    w3, b3 = linear(k3, 16, 16)    # Linear(16, 16)
    w4, b4 = linear(k4, 16, 4)     # Linear(16, 4)
    return {"w1": w1, "b1": b1, "w2": w2, "b2": b2,
            "w3": w3, "b3": b3, "w4": w4, "b4": b4}


def reference(x, params):
    h = jnp.tanh(x @ params["w1"].T + params["b1"].T)
    h = jnp.tanh(h @ params["w2"].T + params["b2"].T)
    h = jnp.tanh(h @ params["w3"].T + params["b3"].T)
    h = jnp.tanh(h @ params["w4"].T + params["b4"].T)
    return h * 50.0


if __name__ == "__main__":
    key = jax.random.PRNGKey(0)
    kx, kp = jax.random.split(key)
    params = init_params(kp)

    # Small case: B=8 -> one partially filled 128-lane tile.
    x_small = jax.random.normal(kx, (8, 4), dtype=jnp.float32)
    out_small = jax.block_until_ready(
        controller_external_derivatives_v1(x_small, params))
    np.testing.assert_allclose(np.asarray(out_small),
                               np.asarray(reference(x_small, params)),
                               rtol=1e-5, atol=1e-5)

    # Medium ragged case, default tile: B=1000 -> bt=512, 2 exact tiles
    # (exercises the two-tile split for v7x megacore).
    x_med = jax.random.normal(kx, (1000, 4), dtype=jnp.float32)
    out_med = jax.block_until_ready(
        controller_external_derivatives_v1(x_med, params))
    np.testing.assert_allclose(np.asarray(out_med),
                               np.asarray(reference(x_med, params)),
                               rtol=1e-5, atol=1e-5)

    # Non-multiple-of-128 user tile: rounded up to 384 -> 3 tiles, ragged last
    # block handled by Pallas boundary masking.
    out_odd = jax.block_until_ready(
        controller_external_derivatives_v1(x_med, params, batch_tile=300))
    np.testing.assert_allclose(np.asarray(out_odd),
                               np.asarray(reference(x_med, params)),
                               rtol=1e-5, atol=1e-5)

    print("KERNEL_OK")
</pallas_src>

<mosaic_0001>
module attributes {stable_mosaic.version = 11 : i64} {
  func.func @_mlp_kernel(%arg0: i32, %arg1: memref<4x128xf32, #tpu.memory_space<vmem>>, %arg2: memref<64x17xf32, #tpu.memory_space<vmem>>, %arg3: memref<4x128xf32, #tpu.memory_space<vmem>>) attributes {dimension_semantics = [#tpu.dimension_semantics<parallel>], iteration_bounds = array<i64: 1>, scalar_prefetch = 0 : i64, scratch_operands = 0 : i64, tpu.core_type = #tpu.core_type<tc>, window_params = [{transform_indices = @transform_0, window_bounds = array<i64: 4, 128>}, {pipeline_mode = #tpu.pipeline_mode<synchronous>, transform_indices = @transform_1, window_bounds = array<i64: 64, 17>}, {transform_indices = @transform_2, window_bounds = array<i64: 4, 128>}]} {
    %c0 = arith.constant 0 : index
    %c0_0 = arith.constant 0 : index
    %0 = vector.load %arg1[%c0, %c0_0] : memref<4x128xf32, #tpu.memory_space<vmem>>, vector<4x128xf32>
    %c0_1 = arith.constant 0 : index
    %c0_2 = arith.constant 0 : index
    %1 = vector.load %arg2[%c0_1, %c0_2] : memref<64x17xf32, #tpu.memory_space<vmem>>, vector<16x4xf32>
    %c0_3 = arith.constant 0 : index
    %c16 = arith.constant 16 : index
    %2 = vector.load %arg2[%c0_3, %c16] : memref<64x17xf32, #tpu.memory_space<vmem>>, vector<16x1xf32>
    %c16_4 = arith.constant 16 : index
    %c0_5 = arith.constant 0 : index
    %3 = vector.load %arg2[%c16_4, %c0_5] : memref<64x17xf32, #tpu.memory_space<vmem>>, vector<16x16xf32>
    %c16_6 = arith.constant 16 : index
    %c16_7 = arith.constant 16 : index
    %4 = vector.load %arg2[%c16_6, %c16_7] : memref<64x17xf32, #tpu.memory_space<vmem>>, vector<16x1xf32>
    %c32 = arith.constant 32 : index
    %c0_8 = arith.constant 0 : index
    %5 = vector.load %arg2[%c32, %c0_8] : memref<64x17xf32, #tpu.memory_space<vmem>>, vector<16x16xf32>
    %c32_9 = arith.constant 32 : index
    %c16_10 = arith.constant 16 : index
    %6 = vector.load %arg2[%c32_9, %c16_10] : memref<64x17xf32, #tpu.memory_space<vmem>>, vector<16x1xf32>
    %c48 = arith.constant 48 : index
    %c0_11 = arith.constant 0 : index
    %7 = vector.load %arg2[%c48, %c0_11] : memref<64x17xf32, #tpu.memory_space<vmem>>, vector<4x16xf32>
    %c48_12 = arith.constant 48 : index
    %c16_13 = arith.constant 16 : index
    %8 = vector.load %arg2[%c48_12, %c16_13] : memref<64x17xf32, #tpu.memory_space<vmem>>, vector<4x1xf32>
    %cst = arith.constant dense<0.000000e+00> : vector<16x128xf32>
    %9 = tpu.matmul %1, %0, %cst {dimension_numbers = #tpu.dot_dimension_numbers<[1], [0], [0], [1], [0, 0, 1, 1], [], []>} : vector<16x4xf32>, vector<4x128xf32>, vector<16x128xf32> -> vector<16x128xf32>
    %10 = vector.broadcast %2 : vector<16x1xf32> to vector<16x128xf32>
    %11 = arith.addf %9, %10 : vector<16x128xf32>
    %12 = math.tanh %11 : vector<16x128xf32>
    %cst_14 = arith.constant dense<0.000000e+00> : vector<16x128xf32>
    %13 = tpu.matmul %3, %12, %cst_14 {dimension_numbers = #tpu.dot_dimension_numbers<[1], [0], [0], [1], [0, 0, 1, 1], [], []>} : vector<16x16xf32>, vector<16x128xf32>, vector<16x128xf32> -> vector<16x128xf32>
    %14 = vector.broadcast %4 : vector<16x1xf32> to vector<16x128xf32>
    %15 = arith.addf %13, %14 : vector<16x128xf32>
    %16 = math.tanh %15 : vector<16x128xf32>
    %cst_15 = arith.constant dense<0.000000e+00> : vector<16x128xf32>
    %17 = tpu.matmul %5, %16, %cst_15 {dimension_numbers = #tpu.dot_dimension_numbers<[1], [0], [0], [1], [0, 0, 1, 1], [], []>} : vector<16x16xf32>, vector<16x128xf32>, vector<16x128xf32> -> vector<16x128xf32>
    %18 = vector.broadcast %6 : vector<16x1xf32> to vector<16x128xf32>
    %19 = arith.addf %17, %18 : vector<16x128xf32>
    %20 = math.tanh %19 : vector<16x128xf32>
    %cst_16 = arith.constant dense<0.000000e+00> : vector<4x128xf32>
    %21 = tpu.matmul %7, %20, %cst_16 {dimension_numbers = #tpu.dot_dimension_numbers<[1], [0], [0], [1], [0, 0, 1, 1], [], []>} : vector<4x16xf32>, vector<16x128xf32>, vector<4x128xf32> -> vector<4x128xf32>
    %22 = vector.broadcast %8 : vector<4x1xf32> to vector<4x128xf32>
    %23 = arith.addf %21, %22 : vector<4x128xf32>
    %24 = math.tanh %23 : vector<4x128xf32>
    %cst_17 = arith.constant 5.000000e+01 : f32
    %25 = vector.broadcast %cst_17 : f32 to vector<4x128xf32>
    %26 = arith.mulf %24, %25 : vector<4x128xf32>
    %c0_18 = arith.constant 0 : index
    %c0_19 = arith.constant 0 : index
    %27 = vector.load %arg3[%c0_18, %c0_19] : memref<4x128xf32, #tpu.memory_space<vmem>>, vector<4x128xf32>
    tpu.vector_store %arg3[%c0_18, %c0_19], %26 {strides = array<i32>} : memref<4x128xf32, #tpu.memory_space<vmem>>, vector<4x128xf32>,
    return
  }
  func.func @transform_0(%arg0: i32) -> (i32, i32) {
    %c0_i32 = arith.constant 0 : i32
    %c0_i32_0 = arith.constant 0 : i32
    return %c0_i32, %arg0 : i32, i32
  }
  func.func @transform_1(%arg0: i32) -> (i32, i32) {
    %c0_i32 = arith.constant 0 : i32
    %c0_i32_0 = arith.constant 0 : i32
    %c0_i32_1 = arith.constant 0 : i32
    return %c0_i32, %c0_i32_0 : i32, i32
  }
  func.func @transform_2(%arg0: i32) -> (i32, i32) {
    %c0_i32 = arith.constant 0 : i32
    %c0_i32_0 = arith.constant 0 : i32
    return %c0_i32, %arg0 : i32, i32
  }
}

</mosaic_0001>

<llo_original>
// kernel: tpu_custom_call.1
$region0: #{tpu_custom_call.1}
  #allocation0 [shape = 'u32[]', space=smem, size = 0x4, offset = 0x4, fixed_abs, tag = 'smem constant byte address 0x4 - core index']
  #allocation1 [shape = 'u32[72,128]{1,0:T(1,128)}', space=vmem, size = 0x9000, scoped, tag = 'internal scratch']
  %s0 = inlined_call_operand.vmem [shape: f32[4,128], index: 0, kind: input, shape index: {}]
  %s1 = inlined_call_operand.vmem [shape: f32[64,17], index: 1, kind: input, shape index: {}]
  %s2 = inlined_call_operand.hbm [shape: f32[4,128], index: 2, kind: output, shape index: {}]
  %s3 = sld [smem:[#allocation0]]
  $region18: #{tpu_custom_call.1} parent=0
    _
  %s5 = ssub.s32 1, %s3
  %s6 = scalar_select 0, %s5, %s3
  $region1: #{tpu_custom_call.1} parent=0
    #allocation2 [shape = 'u8[2048]{0}', space=vmem, size = 0x800, scoped, tag = 'output window, operand 0, single buffered']
    #allocation3 [shape = 's32[1]{0}', space=sflag, size = 0x4, scoped, tag = 'scoped memory for tpu_custom_call.1']
    %7 = vsyncpa [#allocation3], 0
    // Predicated region
    $region2: #{tpu_custom_call.1} parent=1 // pred_check
      _
    $region3: #{tpu_custom_call.1} parent=1 // pred_check_branch
      %9 = sbr.rel (0) target = $region5
    $region4: #{tpu_custom_call.1} parent=1 // pred_region
      _
    $region5: #{tpu_custom_call.1} parent=1 // pred_fallthru
      _
    // Predicated region
    $region6: #{tpu_custom_call.1} parent=1 // pred_check
      _
    $region7: #{tpu_custom_call.1} parent=1 // pred_check_branch
      %11 = sbr.rel (0) target = $region9
    $region8: #{tpu_custom_call.1} parent=1 // pred_region
      _
    $region9: #{tpu_custom_call.1} parent=1 // pred_fallthru
      _
    %v12 = vld [vmem:[%s0] sm:$0xf]
    %v13 = vld [vmem:[%s1] sm:$0xff]
    %v14 = vld [vmem:[%s1 + $0x8] sm:$0xff]
    %v15 = vld [vmem:[%s1 + $0x10] sm:$0xff]
    %v16 = vld [vmem:[%s1 + $0x18] sm:$0xff]
    %v17 = vld [vmem:[%s1 + $0x20] sm:$0xff]
    %v18 = vld [vmem:[%s1 + $0x28] sm:$0xff]
    %v19 = vld [vmem:[%s1 + $0x30] sm:$0xf]
    %21 = vset.pattern.permute.xlu0 16
    %22 = vperm.xlu0 %21, %v13
    %v23 = vpop.permute.xlu0 %22
    %26 = vset.pattern.permute.xlu0 16
    %27 = vperm.xlu0 %26, %v14
    %v28 = vpop.permute.xlu0 %27
    %vm30 = vcmask 31744
    %v31 = vsel %vm30, %v13, 0
    %v33 = vsel %vm30, %v14, 0
    %vm35 = vcmask 1043456
    %v37 = vsel %vm35, %v12, 0
    %39 = vmatpush.msra.mxu0 0.0
    %40 = vmatpush.msra.mxu0 0.0
    %41 = vmatpush.msra.mxu0 0.0
    %42 = vmatpush.msra.mxu0 0.0
    %43 = vmatpush.msra.mxu0 0.0
    %44 = vmatpush.msra.mxu0 0.0
    %45 = vmatpush.msra.mxu0 0.0
    %46 = vmatpush.msra.mxu0 0.0
    %47 = vmatpush.msra.mxu0 0.0
    %48 = vmatpush.msra.mxu0 0.0
    %49 = vmatpush.msra.mxu0 0.0
    %50 = vmatpush.msra.mxu0 0.0
    %51 = vmatpush.msra.mxu0 0.0
    %52 = vmatpush.msra.mxu0 0.0
    %53 = vmatpush.msra.mxu0 0.0
    %54 = vmatpush.msra.mxu0 %v37
    %55 = vmatmul.f32.gmra.mxu0 %v31
    %v56 = vpop.f32.mrf.mxu0
    %v57 = vadd.f32 %v23, %v56
    %58 = vmatmul.f32.gmra.mxu0 %v33
    %v59 = vpop.f32.mrf.mxu0
    %v60 = vadd.f32 %v28, %v59
    %61 = vdwg.mxu0
    %v62 = vtanh.pop %v57
    %v63 = vtanh.pop %v60
    %65 = vset.pattern.permute.xlu0 16
    %66 = vperm.xlu0 %65, %v15
    %v67 = vpop.permute.xlu0 %66
    %70 = vset.pattern.permute.xlu0 16
    %71 = vperm.xlu0 %70, %v16
    %v72 = vpop.permute.xlu0 %71
    %vm74 = vcmask 130048
    %v75 = vsel %vm74, %v15, 0
    %v77 = vsel %vm74, %v16, 0
    %79 = vmatpush.msra.mxu0 0.0
    %80 = vmatpush.msra.mxu0 0.0
    %81 = vmatpush.msra.mxu0 0.0
    %82 = vmatpush.msra.mxu0 0.0
    %83 = vmatpush.msra.mxu0 0.0
    %84 = vmatpush.msra.mxu0 0.0
    %85 = vmatpush.msra.mxu0 0.0
    %86 = vmatpush.msra.mxu0 0.0
    %87 = vmatpush.msra.mxu0 0.0
    %88 = vmatpush.msra.mxu0 0.0
    %89 = vmatpush.msra.mxu0 0.0
    %90 = vmatpush.msra.mxu0 0.0
    %91 = vmatpush.msra.mxu0 0.0
    %92 = vmatpush.msra.mxu0 0.0
    %93 = vmatpush.msra.mxu0 %v63
    %94 = vmatpush.msra.mxu0 %v62
    %95 = vmatmul.f32.gmra.mxu0 %v75
    %v96 = vpop.f32.mrf.mxu0
    %v97 = vadd.f32 %v67, %v96
    %98 = vmatmul.f32.gmra.mxu0 %v77
    %v99 = vpop.f32.mrf.mxu0
    %v100 = vadd.f32 %v72, %v99
    %101 = vdwg.mxu0
    %v102 = vtanh.pop %v97
    %v103 = vtanh.pop %v100
    %105 = vset.pattern.permute.xlu0 16
    %106 = vperm.xlu0 %105, %v17
    %v107 = vpop.permute.xlu0 %106
    %110 = vset.pattern.permute.xlu0 16
    %111 = vperm.xlu0 %110, %v18
    %v112 = vpop.permute.xlu0 %111
    %v114 = vsel %vm74, %v17, 0
    %v116 = vsel %vm74, %v18, 0
    %118 = vmatpush.msra.mxu0 0.0
    %119 = vmatpush.msra.mxu0 0.0
    %120 = vmatpush.msra.mxu0 0.0
    %121 = vmatpush.msra.mxu0 0.0
    %122 = vmatpush.msra.mxu0 0.0
    %123 = vmatpush.msra.mxu0 0.0
    %124 = vmatpush.msra.mxu0 0.0
    %125 = vmatpush.msra.mxu0 0.0
    %126 = vmatpush.msra.mxu0 0.0
    %127 = vmatpush.msra.mxu0 0.0
    %128 = vmatpush.msra.mxu0 0.0
    %129 = vmatpush.msra.mxu0 0.0
    %130 = vmatpush.msra.mxu0 0.0
    %131 = vmatpush.msra.mxu0 0.0
    %132 = vmatpush.msra.mxu0 %v103
    %133 = vmatpush.msra.mxu0 %v102
    %134 = vmatmul.f32.gmra.mxu0 %v114
    %v135 = vpop.f32.mrf.mxu0
    %v136 = vadd.f32 %v107, %v135
    %137 = vmatmul.f32.gmra.mxu0 %v116
    %v138 = vpop.f32.mrf.mxu0
    %v139 = vadd.f32 %v112, %v138
    %140 = vdwg.mxu0
    %v141 = vtanh.pop %v136
    %v142 = vtanh.pop %v139
    %144 = vset.pattern.permute.xlu0 16
    %145 = vperm.xlu0 %144, %v19
    %v146 = vpop.permute.xlu0 %145
    %v148 = vsel %vm74, %v19, 0
    %150 = vmatpush.msra.mxu0 0.0
    %151 = vmatpush.msra.mxu0 0.0
    %152 = vmatpush.msra.mxu0 0.0
    %153 = vmatpush.msra.mxu0 0.0
    %154 = vmatpush.msra.mxu0 0.0
    %155 = vmatpush.msra.mxu0 0.0
    %156 = vmatpush.msra.mxu0 0.0
    %157 = vmatpush.msra.mxu0 0.0
    %158 = vmatpush.msra.mxu0 0.0
    %159 = vmatpush.msra.mxu0 0.0
    %160 = vmatpush.msra.mxu0 0.0
    %161 = vmatpush.msra.mxu0 0.0
    %162 = vmatpush.msra.mxu0 0.0
    %163 = vmatpush.msra.mxu0 0.0
    %164 = vmatpush.msra.mxu0 %v142
    %165 = vmatpush.msra.mxu0 %v141
    %166 = vmatmul.f32.gmra.mxu0 %v148
    %v167 = vpop.f32.mrf.mxu0
    %v168 = vadd.f32 %v146, %v167
    %169 = vdwg.mxu0
    %v170 = vtanh.pop %v168
    %v171 = vmul.f32 %v170, 50.0
    %172 = vst [vmem:[#allocation2] sm:$0xf] %v171
    // Predicated region
    $region10: #{tpu_custom_call.1} parent=1 // pred_check
      _
    $region11: #{tpu_custom_call.1} parent=1 // pred_check_branch
      %174 = sbr.rel (0) target = $region13
    $region12: #{tpu_custom_call.1} parent=1 // pred_region
      %176 = vsyncadd [#allocation3], 0
      %s178 = sshll.u32 [#allocation2], 4
      %s179 = int_to_ptr.vmem [resolvable:$true] %s178
      %s180 = sshll.u32 %s2, 4
      %s181 = int_to_ptr.hbm [resolvable:$true] %s180
      %183 = dma.vmem_to_hbm [thread:$0]  %s179, 64, %s181, [#allocation3]
    $region13: #{tpu_custom_call.1} parent=1 // pred_fallthru
      _
    // Predicated region
    $region14: #{tpu_custom_call.1} parent=1 // pred_check
      _
    $region15: #{tpu_custom_call.1} parent=1 // pred_check_branch
      %185 = sbr.rel (0) target = $region17
    $region16: #{tpu_custom_call.1} parent=1 // pred_region
      %187 = dma.done [#allocation3], 64
    $region17: #{tpu_custom_call.1} parent=1 // pred_fallthru
      _
    %188 = vsyncpa [#allocation3], 1

</llo_original>
